<compile_context>
chip_gen: v7x
topology: tpu7x:2x2x1
jax: 0.10.0
libtpu: 0.0.40
codegen_flags: <defaults>
</compile_context>

<pallas_src>
import jax
import jax.numpy as jnp
from jax import lax
from jax.experimental import pallas as pl
from jax.experimental.pallas import tpu as pltpu


TEMPERATURE = 0.03
NEGATIVE_W = 0.8
# nn.Parameter logit_scale exists in __init__ but is unused in forward();
# noted for parity only.


def _round_up(x, m):
    return (x + m - 1) // m * m


def _device_vmem_and_kind():
    """Best-effort physical VMEM bytes (per core) and device-kind string."""
    vmem_cap = None
    try:
        info = pltpu.get_tpu_info()
        cap = int(getattr(info, "vmem_capacity_bytes", 0) or 0)
        vmem_cap = cap if cap > 0 else None
    except Exception:
        vmem_cap = None
    kind = ""
    try:
        kind = jax.devices()[0].device_kind.lower()
    except Exception:
        pass
    if vmem_cap is None:
        # Conservative default: v7x has 64 MiB per TensorCore (v5e/v6e: 128).
        vmem_cap = 64 * 2**20
    return vmem_cap, kind


def _estimate_vmem(batch, d_pad, tq, itemsize):
    """Rough per-core VMEM footprint estimate for a given query tile."""
    b_pad = _round_up(batch, tq)
    key_bytes = 2 * 2 * b_pad * d_pad * itemsize     # 2 inputs, <=2 buffers
    q_bytes = 2 * tq * d_pad * (itemsize + 4)        # query slices + f32 casts
    slab_bytes = 8 * tq * b_pad * 4                  # live (tq, B) f32 slabs
    return b_pad, key_bytes + q_bytes + slab_bytes + (2 << 20)


def _choose_tile(batch, d_pad, itemsize, vmem_cap, kind):
    tq = min(128, _round_up(batch, 8))
    b_pad, est = _estimate_vmem(batch, d_pad, tq, itemsize)
    is_v5e = ("v5 lite" in kind) or ("v5e" in kind) or ("v5litepod" in kind)
    if batch >= 256 and not is_v5e:
        # Fill the 256-wide MXU on v6e/v7x, but only when the larger (TQ, B)
        # temporaries still leave ~24 MiB of headroom (v7x: 64 MiB VMEM).
        b_pad256, est256 = _estimate_vmem(batch, d_pad, 256, itemsize)
        if est256 <= vmem_cap - 24 * 2**20:
            return 256, b_pad256, est256
    return tq, b_pad, est


def _make_kernel(batch, b_pad, tq, negative_w):
    def kernel(v_ref, t_ref, out_ref):
        f32 = jnp.float32
        neg_w = f32(negative_w)
        neg_inf = f32(-1e30)

        tile = pl.program_id(0)
        q_start = pl.multiple_of(tile * tq, tq)

        # Pre-normalized (and sqrt(1/T)-scaled) operands from the wrapper.
        v_keys = v_ref[...]                       # (b_pad, d_pad)
        t_keys = t_ref[...]
        v_q = v_ref[pl.ds(q_start, tq), :]        # (tq, d_pad)
        t_q = t_ref[pl.ds(q_start, tq), :]

        row_g = q_start + lax.broadcasted_iota(jnp.int32, (tq, b_pad), 0)
        col_g = lax.broadcasted_iota(jnp.int32, (tq, b_pad), 1)
        is_diag = row_g == col_g
        col_valid = col_g < batch

        # Positive logit cross[i, i] = <v_i, t_i>/T — identical for the video
        # and the text side, so compute it once as a row-wise dot (cheaper
        # than two (tq, B) masked extractions + B-wide reductions).
        pos = jnp.sum(v_q.astype(f32) * t_q.astype(f32), axis=1, keepdims=True)

        def sim(a, b):
            # (tq, D) x (B, D)^T -> (tq, B), f32 accumulation on the MXU.
            return lax.dot_general(a, b, (((1,), (1,)), ((), ())),
                                   preferred_element_type=f32)

        def side_loss(q, cross_keys, self_keys):
            # -log((softmax(cat([cross, negw*clstr*(1-eye)],1)) * cat([eye,0],1)).sum(1))
            #   == logsumexp(cat([cross, neg], 1)) - cross[i, i]
            # (Zeroed clstr diagonal still contributes exp(0) to the
            #  denominator — intentional, matches the PyTorch module.)
            cross = sim(q, cross_keys)
            neg = jnp.where(is_diag, f32(0.0), sim(q, self_keys) * neg_w)
            if b_pad != batch:
                cross = jnp.where(col_valid, cross, neg_inf)
                neg = jnp.where(col_valid, neg, neg_inf)
            m = jnp.maximum(jnp.max(cross, axis=1, keepdims=True),
                            jnp.max(neg, axis=1, keepdims=True))
            s = (jnp.sum(jnp.exp(cross - m), axis=1, keepdims=True)
                 + jnp.sum(jnp.exp(neg - m), axis=1, keepdims=True))
            return jnp.log(s) + m - pos            # (tq, 1)

        # Video side fully, then text side -> halves peak live (tq, B) slabs.
        loss_i = side_loss(v_q, t_keys, v_keys)
        loss_t = side_loss(t_q, v_keys, t_keys)

        if b_pad != batch:
            row_valid = (q_start
                         + lax.broadcasted_iota(jnp.int32, (tq, 1), 0)) < batch
            loss_i = jnp.where(row_valid, loss_i, f32(0.0))
            loss_t = jnp.where(row_valid, loss_t, f32(0.0))

        partial = jnp.sum(loss_i) + jnp.sum(loss_t)
        # Lane-dense per-tile partial (unmasked full-vreg store).
        out_ref[...] = jnp.zeros((1, 8, 128), jnp.float32) + partial

    return kernel


def crossclr_only_intra_modality(video_features, text_features,
                                 temperature=TEMPERATURE,
                                 negative_weight=NEGATIVE_W):
    """Scalar loss matching CrossCLR_onlyIntraModality.forward."""
    assert video_features.shape == text_features.shape
    batch, dim = video_features.shape

    d_pad = _round_up(max(dim, 128), 128)              # lane-aligned MXU K
    # bf16 inputs keep bf16 MXU operands (f32 accumulation); f32 inputs use
    # the accurate f32 matmul path (logits reach ~1/T so bf16 operands would
    # risk the tolerance for f32 callers).
    mm_dtype = (jnp.bfloat16 if video_features.dtype == jnp.bfloat16
                else jnp.float32)
    itemsize = jnp.dtype(mm_dtype).itemsize

    vmem_cap, kind = _device_vmem_and_kind()
    tq, b_pad, est = _choose_tile(batch, d_pad, itemsize, vmem_cap, kind)
    n_tiles = b_pad // tq

    # Clamp the scoped-VMEM request to physical capacity minus headroom
    # (v7x: 64 MiB per TensorCore; v5e/v6e: 128 MiB).
    vmem_limit = int(min(vmem_cap - 8 * 2**20, max(32 * 2**20, 2 * est)))

    inv_temp_sqrt = float(1.0 / temperature) ** 0.5

    def prep(x):
        # F.normalize(x, dim=1) == x * rsqrt(max(||x||^2, 1e-24)); sqrt(1/T)
        # folded into both operands so every kernel matmul already carries
        # 1/T.  Done ONCE here in XLA, not per grid step inside the kernel.
        x = x.astype(jnp.float32)
        ss = jnp.sum(x * x, axis=1, keepdims=True)
        y = x * lax.rsqrt(jnp.maximum(ss, jnp.float32(1e-24)))
        y = (y * jnp.float32(inv_temp_sqrt)).astype(mm_dtype)
        return jnp.pad(y, ((0, b_pad - batch), (0, d_pad - dim)))

    v = prep(video_features)
    t = prep(text_features)

    kernel = _make_kernel(batch, b_pad, tq, negative_weight)

    def build(single_buffer_keys):
        spec_kwargs = {}
        if single_buffer_keys:
            # Constant-index keys: a revolving second buffer buys nothing;
            # single buffering halves resident key VMEM.
            spec_kwargs["pipeline_mode"] = pl.Buffered(1)
        key_spec = pl.BlockSpec((b_pad, d_pad), lambda i: (0, 0), **spec_kwargs)
        return pl.pallas_call(
            kernel,
            out_shape=jax.ShapeDtypeStruct((n_tiles, 8, 128), jnp.float32),
            grid=(n_tiles,),
            in_specs=[key_spec, key_spec],
            out_specs=pl.BlockSpec((1, 8, 128), lambda i: (i, 0, 0)),
            compiler_params=pltpu.CompilerParams(
                dimension_semantics=("parallel",),
                vmem_limit_bytes=vmem_limit,
            ),
        )

    try:
        partials = build(True)(v, t)
    except Exception:
        # JAX versions without BlockSpec(pipeline_mode=pl.Buffered(1)):
        # fall back to default double-buffered specs (still correct).
        partials = build(False)(v, t)

    # (loss_i.mean() + loss_t.mean()) / 2 == (sum_i + sum_t) / (2 * batch)
    return jnp.sum(partials[:, 0, 0]) / (2.0 * batch)


def _reference(video_features, text_features):
    # Pure-JAX reference mirroring the PyTorch module.
    v = video_features / jnp.maximum(
        jnp.linalg.norm(video_features, axis=1, keepdims=True), 1e-12)
    t = text_features / jnp.maximum(
        jnp.linalg.norm(text_features, axis=1, keepdims=True), 1e-12)
    B = v.shape[0]
    hp = jax.lax.Precision.HIGHEST
    lpv = jnp.matmul(v, t.T, precision=hp) / TEMPERATURE
    lpt = jnp.matmul(t, v.T, precision=hp) / TEMPERATURE
    lcv = jnp.matmul(v, v.T, precision=hp) / TEMPERATURE
    lct = jnp.matmul(t, t.T, precision=hp) / TEMPERATURE
    pos_mask = 1.0 - jnp.eye(B)
    neg_v = lcv * pos_mask
    neg_t = lct * pos_mask
    vid_logits = jnp.concatenate([lpv, NEGATIVE_W * neg_v], axis=1)
    txt_logits = jnp.concatenate([lpt, NEGATIVE_W * neg_t], axis=1)
    mask = jnp.concatenate([jnp.eye(B), jnp.zeros((B, B))], axis=1)
    li = -jnp.log(jnp.sum(jax.nn.softmax(vid_logits, axis=1) * mask, axis=1))
    lt = -jnp.log(jnp.sum(jax.nn.softmax(txt_logits, axis=1) * mask, axis=1))
    return (li.mean() + lt.mean()) / 2


if __name__ == "__main__":
    k1, k2, k3, k4 = jax.random.split(jax.random.PRNGKey(0), 4)

    # Test 1: the module's nominal small shape (batch=8, embed_dim=32).
    batch, embed_dim = 8, 32
    video = jax.random.normal(k1, (batch, embed_dim), dtype=jnp.float32)
    text = jax.random.normal(k2, (batch, embed_dim), dtype=jnp.float32)
    loss = crossclr_only_intra_modality(video, text)
    jax.block_until_ready(loss)
    ref = _reference(video, text)
    assert jnp.allclose(loss, ref, rtol=1e-3, atol=1e-3), (loss, ref)

    # Test 2: exercises the multi-tile grid, global diagonal offsets and
    # batch/embed padding masks (batch=160 -> 2 row tiles of 128 with padding).
    b2, d2 = 160, 96
    video2 = jax.random.normal(k3, (b2, d2), dtype=jnp.float32)
    text2 = jax.random.normal(k4, (b2, d2), dtype=jnp.float32)
    loss2 = crossclr_only_intra_modality(video2, text2)
    jax.block_until_ready(loss2)
    ref2 = _reference(video2, text2)
    assert jnp.allclose(loss2, ref2, rtol=1e-3, atol=1e-3), (loss2, ref2)

    print("KERNEL_OK")
</pallas_src>

<mosaic_0001>
module attributes {stable_mosaic.version = 11 : i64} {
  func.func @kernel(%arg0: i32, %arg1: memref<8x128xf32, #tpu.memory_space<vmem>>, %arg2: memref<8x128xf32, #tpu.memory_space<vmem>>, %arg3: memref<1x8x128xf32, #tpu.memory_space<vmem>>) attributes {dimension_semantics = [#tpu.dimension_semantics<parallel>], iteration_bounds = array<i64: 1>, scalar_prefetch = 0 : i64, scratch_operands = 0 : i64, tpu.core_type = #tpu.core_type<tc>, window_params = [{pipeline_mode = #tpu.pipeline_mode<synchronous>, transform_indices = @transform_0, window_bounds = array<i64: 8, 128>}, {pipeline_mode = #tpu.pipeline_mode<synchronous>, transform_indices = @transform_1, window_bounds = array<i64: 8, 128>}, {transform_indices = @transform_2, window_bounds = array<i64: 1, 8, 128>}]} {
    %c8_i32 = arith.constant 8 : i32
    %0 = arith.muli %arg0, %c8_i32 : i32
    %1 = tpu.assume_multiple %0, 8 : i32
    %c0 = arith.constant 0 : index
    %c0_0 = arith.constant 0 : index
    %2 = vector.load %arg1[%c0, %c0_0] : memref<8x128xf32, #tpu.memory_space<vmem>>, vector<8x128xf32>
    %c0_1 = arith.constant 0 : index
    %c0_2 = arith.constant 0 : index
    %3 = vector.load %arg2[%c0_1, %c0_2] : memref<8x128xf32, #tpu.memory_space<vmem>>, vector<8x128xf32>
    %4 = arith.index_cast %1 : i32 to index
    %c0_3 = arith.constant 0 : index
    %5 = vector.load %arg1[%4, %c0_3] : memref<8x128xf32, #tpu.memory_space<vmem>>, vector<8x128xf32>
    %6 = arith.index_cast %1 : i32 to index
    %c0_4 = arith.constant 0 : index
    %7 = vector.load %arg2[%6, %c0_4] : memref<8x128xf32, #tpu.memory_space<vmem>>, vector<8x128xf32>
    %8 = tpu.iota {dimensions = array<i32: 0>} : vector<8x8xi32>
    %9 = vector.broadcast %1 : i32 to vector<8x8xi32>
    %10 = arith.addi %9, %8 : vector<8x8xi32>
    %11 = tpu.iota {dimensions = array<i32: 1>} : vector<8x8xi32>
    %12 = arith.cmpi eq, %10, %11 : vector<8x8xi32>
    %13 = arith.mulf %5, %7 : vector<8x128xf32>
    %cst = arith.constant dense<0.000000e+00> : vector<8xf32>
    %14 = vector.multi_reduction <add>, %13, %cst [1] : vector<8x128xf32> to vector<8xf32>
    %15 = vector.shape_cast %14 : vector<8xf32> to vector<8x1xf32>
    %cst_5 = arith.constant dense<0.000000e+00> : vector<8x8xf32>
    %16 = tpu.matmul %5, %3, %cst_5 {dimension_numbers = #tpu.dot_dimension_numbers<[1], [1], [0], [0], [0, 0, 1, 0], [], []>} : vector<8x128xf32>, vector<8x128xf32>, vector<8x8xf32> -> vector<8x8xf32>
    %cst_6 = arith.constant dense<0.000000e+00> : vector<8x8xf32>
    %17 = tpu.matmul %5, %2, %cst_6 {dimension_numbers = #tpu.dot_dimension_numbers<[1], [1], [0], [0], [0, 0, 1, 0], [], []>} : vector<8x128xf32>, vector<8x128xf32>, vector<8x8xf32> -> vector<8x8xf32>
    %cst_7 = arith.constant 8.000000e-01 : f32
    %18 = vector.broadcast %cst_7 : f32 to vector<8x8xf32>
    %19 = arith.mulf %17, %18 : vector<8x8xf32>
    %cst_8 = arith.constant 0.000000e+00 : f32
    %20 = vector.broadcast %cst_8 : f32 to vector<8x8xf32>
    %21 = arith.select %12, %20, %19 : vector<8x8xi1>, vector<8x8xf32>
    %cst_9 = arith.constant dense<0xFF800000> : vector<8xf32>
    %22 = vector.multi_reduction <maximumf>, %16, %cst_9 [1] : vector<8x8xf32> to vector<8xf32>
    %23 = vector.shape_cast %22 : vector<8xf32> to vector<8x1xf32>
    %cst_10 = arith.constant dense<0xFF800000> : vector<8xf32>
    %24 = vector.multi_reduction <maximumf>, %21, %cst_10 [1] : vector<8x8xf32> to vector<8xf32>
    %25 = vector.shape_cast %24 : vector<8xf32> to vector<8x1xf32>
    %26 = arith.maximumf %23, %25 : vector<8x1xf32>
    %27 = vector.broadcast %26 : vector<8x1xf32> to vector<8x8xf32>
    %28 = arith.subf %16, %27 : vector<8x8xf32>
    %29 = math.exp %28 : vector<8x8xf32>
    %cst_11 = arith.constant dense<0.000000e+00> : vector<8xf32>
    %30 = vector.multi_reduction <add>, %29, %cst_11 [1] : vector<8x8xf32> to vector<8xf32>
    %31 = vector.shape_cast %30 : vector<8xf32> to vector<8x1xf32>
    %32 = vector.broadcast %26 : vector<8x1xf32> to vector<8x8xf32>
    %33 = arith.subf %21, %32 : vector<8x8xf32>
    %34 = math.exp %33 : vector<8x8xf32>
    %cst_12 = arith.constant dense<0.000000e+00> : vector<8xf32>
    %35 = vector.multi_reduction <add>, %34, %cst_12 [1] : vector<8x8xf32> to vector<8xf32>
    %36 = vector.shape_cast %35 : vector<8xf32> to vector<8x1xf32>
    %37 = arith.addf %31, %36 : vector<8x1xf32>
    %38 = math.log %37 : vector<8x1xf32>
    %39 = arith.addf %38, %26 : vector<8x1xf32>
    %40 = arith.subf %39, %15 : vector<8x1xf32>
    %cst_13 = arith.constant dense<0.000000e+00> : vector<8x8xf32>
    %41 = tpu.matmul %7, %2, %cst_13 {dimension_numbers = #tpu.dot_dimension_numbers<[1], [1], [0], [0], [0, 0, 1, 0], [], []>} : vector<8x128xf32>, vector<8x128xf32>, vector<8x8xf32> -> vector<8x8xf32>
    %cst_14 = arith.constant dense<0.000000e+00> : vector<8x8xf32>
    %42 = tpu.matmul %7, %3, %cst_14 {dimension_numbers = #tpu.dot_dimension_numbers<[1], [1], [0], [0], [0, 0, 1, 0], [], []>} : vector<8x128xf32>, vector<8x128xf32>, vector<8x8xf32> -> vector<8x8xf32>
    %cst_15 = arith.constant 8.000000e-01 : f32
    %43 = vector.broadcast %cst_15 : f32 to vector<8x8xf32>
    %44 = arith.mulf %42, %43 : vector<8x8xf32>
    %cst_16 = arith.constant 0.000000e+00 : f32
    %45 = vector.broadcast %cst_16 : f32 to vector<8x8xf32>
    %46 = arith.select %12, %45, %44 : vector<8x8xi1>, vector<8x8xf32>
    %cst_17 = arith.constant dense<0xFF800000> : vector<8xf32>
    %47 = vector.multi_reduction <maximumf>, %41, %cst_17 [1] : vector<8x8xf32> to vector<8xf32>
    %48 = vector.shape_cast %47 : vector<8xf32> to vector<8x1xf32>
    %cst_18 = arith.constant dense<0xFF800000> : vector<8xf32>
    %49 = vector.multi_reduction <maximumf>, %46, %cst_18 [1] : vector<8x8xf32> to vector<8xf32>
    %50 = vector.shape_cast %49 : vector<8xf32> to vector<8x1xf32>
    %51 = arith.maximumf %48, %50 : vector<8x1xf32>
    %52 = vector.broadcast %51 : vector<8x1xf32> to vector<8x8xf32>
    %53 = arith.subf %41, %52 : vector<8x8xf32>
    %54 = math.exp %53 : vector<8x8xf32>
    %cst_19 = arith.constant dense<0.000000e+00> : vector<8xf32>
    %55 = vector.multi_reduction <add>, %54, %cst_19 [1] : vector<8x8xf32> to vector<8xf32>
    %56 = vector.shape_cast %55 : vector<8xf32> to vector<8x1xf32>
    %57 = vector.broadcast %51 : vector<8x1xf32> to vector<8x8xf32>
    %58 = arith.subf %46, %57 : vector<8x8xf32>
    %59 = math.exp %58 : vector<8x8xf32>
    %cst_20 = arith.constant dense<0.000000e+00> : vector<8xf32>
    %60 = vector.multi_reduction <add>, %59, %cst_20 [1] : vector<8x8xf32> to vector<8xf32>
    %61 = vector.shape_cast %60 : vector<8xf32> to vector<8x1xf32>
    %62 = arith.addf %56, %61 : vector<8x1xf32>
    %63 = math.log %62 : vector<8x1xf32>
    %64 = arith.addf %63, %51 : vector<8x1xf32>
    %65 = arith.subf %64, %15 : vector<8x1xf32>
    %66 = vector.shape_cast %40 : vector<8x1xf32> to vector<1x8x1xf32>
    %cst_21 = arith.constant dense<0.000000e+00> : vector<1xf32>
    %67 = vector.multi_reduction <add>, %66, %cst_21 [1, 2] : vector<1x8x1xf32> to vector<1xf32>
    %68 = vector.shape_cast %67 : vector<1xf32> to vector<1x1x1xf32>
    %69 = vector.extract %68[0, 0, 0] : f32 from vector<1x1x1xf32>
    %70 = vector.shape_cast %65 : vector<8x1xf32> to vector<1x8x1xf32>
    %cst_22 = arith.constant dense<0.000000e+00> : vector<1xf32>
    %71 = vector.multi_reduction <add>, %70, %cst_22 [1, 2] : vector<1x8x1xf32> to vector<1xf32>
    %72 = vector.shape_cast %71 : vector<1xf32> to vector<1x1x1xf32>
    %73 = vector.extract %72[0, 0, 0] : f32 from vector<1x1x1xf32>
    %74 = arith.addf %69, %73 : f32
    %cst_23 = arith.constant 0.000000e+00 : f32
    %75 = vector.broadcast %cst_23 : f32 to vector<1x8x128xf32>
    %76 = vector.broadcast %74 : f32 to vector<1x8x128xf32>
    %77 = arith.addf %75, %76 : vector<1x8x128xf32>
    %c0_24 = arith.constant 0 : index
    %c0_25 = arith.constant 0 : index
    %c0_26 = arith.constant 0 : index
    %78 = vector.load %arg3[%c0_24, %c0_25, %c0_26] : memref<1x8x128xf32, #tpu.memory_space<vmem>>, vector<1x8x128xf32>
    tpu.vector_store %arg3[%c0_24, %c0_25, %c0_26], %77 {strides = array<i32>} : memref<1x8x128xf32, #tpu.memory_space<vmem>>, vector<1x8x128xf32>,
    return
  }
  func.func @transform_0(%arg0: i32) -> (i32, i32) {
    %c0_i32 = arith.constant 0 : i32
    %c0_i32_0 = arith.constant 0 : i32
    %c0_i32_1 = arith.constant 0 : i32
    return %c0_i32, %c0_i32_0 : i32, i32
  }
  func.func @transform_1(%arg0: i32) -> (i32, i32) {
    %c0_i32 = arith.constant 0 : i32
    %c0_i32_0 = arith.constant 0 : i32
    %c0_i32_1 = arith.constant 0 : i32
    return %c0_i32, %c0_i32_0 : i32, i32
  }
  func.func @transform_2(%arg0: i32) -> (i32, i32, i32) {
    %c0_i32 = arith.constant 0 : i32
    %c0_i32_0 = arith.constant 0 : i32
    %c0_i32_1 = arith.constant 0 : i32
    return %arg0, %c0_i32, %c0_i32_0 : i32, i32, i32
  }
}

module attributes {stable_mosaic.version = 11 : i64} {
  func.func @kernel(%arg0: i32, %arg1: memref<8x128xf32, #tpu.memory_space<vmem>>, %arg2: memref<8x128xf32, #tpu.memory_space<vmem>>, %arg3: memref<1x8x128xf32, #tpu.memory_space<vmem>>) attributes {dimension_semantics = [#tpu.dimension_semantics<parallel>], iteration_bounds = array<i64: 1>, scalar_prefetch = 0 : i64, scratch_operands = 0 : i64, tpu.core_type = #tpu.core_type<tc>, window_params = [{pipeline_mode = #tpu.pipeline_mode<synchronous>, transform_indices = @transform_0, window_bounds = array<i64: 8, 128>}, {pipeline_mode = #tpu.pipeline_mode<synchronous>, transform_indices = @transform_1, window_bounds = array<i64: 8, 128>}, {transform_indices = @transform_2, window_bounds = array<i64: 1, 8, 128>}]} {
    %c8_i32 = arith.constant 8 : i32
    %0 = arith.muli %arg0, %c8_i32 : i32
    %1 = tpu.assume_multiple %0, 8 : i32
    %c0 = arith.constant 0 : index
    %c0_0 = arith.constant 0 : index
    %2 = vector.load %arg1[%c0, %c0_0] : memref<8x128xf32, #tpu.memory_space<vmem>>, vector<8x128xf32>
    %c0_1 = arith.constant 0 : index
    %c0_2 = arith.constant 0 : index
    %3 = vector.load %arg2[%c0_1, %c0_2] : memref<8x128xf32, #tpu.memory_space<vmem>>, vector<8x128xf32>
    %4 = arith.index_cast %1 : i32 to index
    %c0_3 = arith.constant 0 : index
    %5 = vector.load %arg1[%4, %c0_3] : memref<8x128xf32, #tpu.memory_space<vmem>>, vector<8x128xf32>
    %6 = arith.index_cast %1 : i32 to index
    %c0_4 = arith.constant 0 : index
    %7 = vector.load %arg2[%6, %c0_4] : memref<8x128xf32, #tpu.memory_space<vmem>>, vector<8x128xf32>
    %8 = tpu.iota {dimensions = array<i32: 0>} : vector<8x8xi32>
    %9 = vector.broadcast %1 : i32 to vector<8x8xi32>
    %10 = arith.addi %9, %8 : vector<8x8xi32>
    %11 = tpu.iota {dimensions = array<i32: 1>} : vector<8x8xi32>
    %12 = arith.cmpi eq, %10, %11 : vector<8x8xi32>
    %13 = arith.mulf %5, %7 : vector<8x128xf32>
    %cst = arith.constant dense<0.000000e+00> : vector<8xf32>
    %14 = vector.multi_reduction <add>, %13, %cst [1] : vector<8x128xf32> to vector<8xf32>
    %15 = vector.shape_cast %14 : vector<8xf32> to vector<8x1xf32>
    %cst_5 = arith.constant dense<0.000000e+00> : vector<8x8xf32>
    %16 = tpu.matmul %5, %3, %cst_5 {dimension_numbers = #tpu.dot_dimension_numbers<[1], [1], [0], [0], [0, 0, 1, 0], [], []>} : vector<8x128xf32>, vector<8x128xf32>, vector<8x8xf32> -> vector<8x8xf32>
    %cst_6 = arith.constant dense<0.000000e+00> : vector<8x8xf32>
    %17 = tpu.matmul %5, %2, %cst_6 {dimension_numbers = #tpu.dot_dimension_numbers<[1], [1], [0], [0], [0, 0, 1, 0], [], []>} : vector<8x128xf32>, vector<8x128xf32>, vector<8x8xf32> -> vector<8x8xf32>
    %cst_7 = arith.constant 8.000000e-01 : f32
    %18 = vector.broadcast %cst_7 : f32 to vector<8x8xf32>
    %19 = arith.mulf %17, %18 : vector<8x8xf32>
    %cst_8 = arith.constant 0.000000e+00 : f32
    %20 = vector.broadcast %cst_8 : f32 to vector<8x8xf32>
    %21 = arith.select %12, %20, %19 : vector<8x8xi1>, vector<8x8xf32>
    %cst_9 = arith.constant dense<0xFF800000> : vector<8xf32>
    %22 = vector.multi_reduction <maximumf>, %16, %cst_9 [1] : vector<8x8xf32> to vector<8xf32>
    %23 = vector.shape_cast %22 : vector<8xf32> to vector<8x1xf32>
    %cst_10 = arith.constant dense<0xFF800000> : vector<8xf32>
    %24 = vector.multi_reduction <maximumf>, %21, %cst_10 [1] : vector<8x8xf32> to vector<8xf32>
    %25 = vector.shape_cast %24 : vector<8xf32> to vector<8x1xf32>
    %26 = arith.maximumf %23, %25 : vector<8x1xf32>
    %27 = vector.broadcast %26 : vector<8x1xf32> to vector<8x8xf32>
    %28 = arith.subf %16, %27 : vector<8x8xf32>
    %29 = math.exp %28 : vector<8x8xf32>
    %cst_11 = arith.constant dense<0.000000e+00> : vector<8xf32>
    %30 = vector.multi_reduction <add>, %29, %cst_11 [1] : vector<8x8xf32> to vector<8xf32>
    %31 = vector.shape_cast %30 : vector<8xf32> to vector<8x1xf32>
    %32 = vector.broadcast %26 : vector<8x1xf32> to vector<8x8xf32>
    %33 = arith.subf %21, %32 : vector<8x8xf32>
    %34 = math.exp %33 : vector<8x8xf32>
    %cst_12 = arith.constant dense<0.000000e+00> : vector<8xf32>
    %35 = vector.multi_reduction <add>, %34, %cst_12 [1] : vector<8x8xf32> to vector<8xf32>
    %36 = vector.shape_cast %35 : vector<8xf32> to vector<8x1xf32>
    %37 = arith.addf %31, %36 : vector<8x1xf32>
    %38 = math.log %37 : vector<8x1xf32>
    %39 = arith.addf %38, %26 : vector<8x1xf32>
    %40 = arith.subf %39, %15 : vector<8x1xf32>
    %cst_13 = arith.constant dense<0.000000e+00> : vector<8x8xf32>
    %41 = tpu.matmul %7, %2, %cst_13 {dimension_numbers = #tpu.dot_dimension_numbers<[1], [1], [0], [0], [0, 0, 1, 0], [], []>} : vector<8x128xf32>, vector<8x128xf32>, vector<8x8xf32> -> vector<8x8xf32>
    %cst_14 = arith.constant dense<0.000000e+00> : vector<8x8xf32>
    %42 = tpu.matmul %7, %3, %cst_14 {dimension_numbers = #tpu.dot_dimension_numbers<[1], [1], [0], [0], [0, 0, 1, 0], [], []>} : vector<8x128xf32>, vector<8x128xf32>, vector<8x8xf32> -> vector<8x8xf32>
    %cst_15 = arith.constant 8.000000e-01 : f32
    %43 = vector.broadcast %cst_15 : f32 to vector<8x8xf32>
    %44 = arith.mulf %42, %43 : vector<8x8xf32>
    %cst_16 = arith.constant 0.000000e+00 : f32
    %45 = vector.broadcast %cst_16 : f32 to vector<8x8xf32>
    %46 = arith.select %12, %45, %44 : vector<8x8xi1>, vector<8x8xf32>
    %cst_17 = arith.constant dense<0xFF800000> : vector<8xf32>
    %47 = vector.multi_reduction <maximumf>, %41, %cst_17 [1] : vector<8x8xf32> to vector<8xf32>
    %48 = vector.shape_cast %47 : vector<8xf32> to vector<8x1xf32>
    %cst_18 = arith.constant dense<0xFF800000> : vector<8xf32>
    %49 = vector.multi_reduction <maximumf>, %46, %cst_18 [1] : vector<8x8xf32> to vector<8xf32>
    %50 = vector.shape_cast %49 : vector<8xf32> to vector<8x1xf32>
    %51 = arith.maximumf %48, %50 : vector<8x1xf32>
    %52 = vector.broadcast %51 : vector<8x1xf32> to vector<8x8xf32>
    %53 = arith.subf %41, %52 : vector<8x8xf32>
    %54 = math.exp %53 : vector<8x8xf32>
    %cst_19 = arith.constant dense<0.000000e+00> : vector<8xf32>
    %55 = vector.multi_reduction <add>, %54, %cst_19 [1] : vector<8x8xf32> to vector<8xf32>
    %56 = vector.shape_cast %55 : vector<8xf32> to vector<8x1xf32>
    %57 = vector.broadcast %51 : vector<8x1xf32> to vector<8x8xf32>
    %58 = arith.subf %46, %57 : vector<8x8xf32>
    %59 = math.exp %58 : vector<8x8xf32>
    %cst_20 = arith.constant dense<0.000000e+00> : vector<8xf32>
    %60 = vector.multi_reduction <add>, %59, %cst_20 [1] : vector<8x8xf32> to vector<8xf32>
    %61 = vector.shape_cast %60 : vector<8xf32> to vector<8x1xf32>
    %62 = arith.addf %56, %61 : vector<8x1xf32>
    %63 = math.log %62 : vector<8x1xf32>
    %64 = arith.addf %63, %51 : vector<8x1xf32>
    %65 = arith.subf %64, %15 : vector<8x1xf32>
    %66 = vector.shape_cast %40 : vector<8x1xf32> to vector<1x8x1xf32>
    %cst_21 = arith.constant dense<0.000000e+00> : vector<1xf32>
    %67 = vector.multi_reduction <add>, %66, %cst_21 [1, 2] : vector<1x8x1xf32> to vector<1xf32>
    %68 = vector.shape_cast %67 : vector<1xf32> to vector<1x1x1xf32>
    %69 = vector.extract %68[0, 0, 0] : f32 from vector<1x1x1xf32>
    %70 = vector.shape_cast %65 : vector<8x1xf32> to vector<1x8x1xf32>
    %cst_22 = arith.constant dense<0.000000e+00> : vector<1xf32>
    %71 = vector.multi_reduction <add>, %70, %cst_22 [1, 2] : vector<1x8x1xf32> to vector<1xf32>
    %72 = vector.shape_cast %71 : vector<1xf32> to vector<1x1x1xf32>
    %73 = vector.extract %72[0, 0, 0] : f32 from vector<1x1x1xf32>
    %74 = arith.addf %69, %73 : f32
    %cst_23 = arith.constant 0.000000e+00 : f32
    %75 = vector.broadcast %cst_23 : f32 to vector<1x8x128xf32>
    %76 = vector.broadcast %74 : f32 to vector<1x8x128xf32>
    %77 = arith.addf %75, %76 : vector<1x8x128xf32>
    %c0_24 = arith.constant 0 : index
    %c0_25 = arith.constant 0 : index
    %c0_26 = arith.constant 0 : index
    %78 = vector.load %arg3[%c0_24, %c0_25, %c0_26] : memref<1x8x128xf32, #tpu.memory_space<vmem>>, vector<1x8x128xf32>
    tpu.vector_store %arg3[%c0_24, %c0_25, %c0_26], %77 {strides = array<i32>} : memref<1x8x128xf32, #tpu.memory_space<vmem>>, vector<1x8x128xf32>,
    return
  }
  func.func @transform_0(%arg0: i32) -> (i32, i32) {
    %c0_i32 = arith.constant 0 : i32
    %c0_i32_0 = arith.constant 0 : i32
    %c0_i32_1 = arith.constant 0 : i32
    return %c0_i32, %c0_i32_0 : i32, i32
  }
  func.func @transform_1(%arg0: i32) -> (i32, i32) {
    %c0_i32 = arith.constant 0 : i32
    %c0_i32_0 = arith.constant 0 : i32
    %c0_i32_1 = arith.constant 0 : i32
    return %c0_i32, %c0_i32_0 : i32, i32
  }
  func.func @transform_2(%arg0: i32) -> (i32, i32, i32) {
    %c0_i32 = arith.constant 0 : i32
    %c0_i32_0 = arith.constant 0 : i32
    %c0_i32_1 = arith.constant 0 : i32
    return %arg0, %c0_i32, %c0_i32_0 : i32, i32, i32
  }
}

</mosaic_0001>

<llo_original>
// kernel: tpu_custom_call.1
$region0: #{tpu_custom_call.1}
  #allocation0 [shape = 'u32[]', space=smem, size = 0x4, offset = 0x4, fixed_abs, tag = 'smem constant byte address 0x4 - core index']
  #allocation1 [shape = 'u32[144,128]{1,0:T(1,128)}', space=vmem, size = 0x12000, scoped, tag = 'internal scratch']
  %s0 = inlined_call_operand.hbm [shape: f32[8,128], index: 0, kind: input, shape index: {}]
  %s1 = inlined_call_operand.hbm [shape: f32[8,128], index: 1, kind: input, shape index: {}]
  %s2 = inlined_call_operand.hbm [shape: f32[1,8,128], index: 2, kind: output, shape index: {}]
  %s3 = sld [smem:[#allocation0]]
  $region26: #{tpu_custom_call.1} parent=0
    _
  %s5 = ssub.s32 1, %s3
  %s6 = scalar_select 0, %s5, %s3
  $region1: #{tpu_custom_call.1} parent=0
    #allocation2 [shape = 'u8[4096]{0}', space=vmem, size = 0x1000, scoped, tag = 'input window, operand 0, single buffered']
    #allocation3 [shape = 's32[1]{0}', space=sflag, size = 0x4, scoped, tag = 'scoped memory for tpu_custom_call.1']
    #allocation4 [shape = 's32[1]{0}', space=sflag, size = 0x4, scoped, tag = 'scoped memory for tpu_custom_call.1']
    #allocation5 [shape = 'u8[4096]{0}', space=vmem, size = 0x1000, scoped, tag = 'input window, operand 1, single buffered']
    #allocation6 [shape = 's32[1]{0}', space=sflag, size = 0x4, scoped, tag = 'scoped memory for tpu_custom_call.1']
    #allocation7 [shape = 'u8[4096]{0}', space=vmem, size = 0x1000, scoped, tag = 'output window, operand 0, single buffered']
    %7 = vsyncpa [#allocation3], 0
    %8 = vsyncpa [#allocation6], 0
    %9 = vsyncpa [#allocation4], 0
    // Predicated region
    $region2: #{tpu_custom_call.1} parent=1 // pred_check
      _
    $region3: #{tpu_custom_call.1} parent=1 // pred_check_branch
      %11 = sbr.rel (0) target = $region5
    $region4: #{tpu_custom_call.1} parent=1 // pred_region
      %s13 = ssub.s32 128, 128
      %14 = vsyncadd [#allocation3], %s13
      %s16 = sshll.u32 [#allocation2], 4
      %s17 = int_to_ptr.vmem [resolvable:$true] %s16
      %19 = dma.hbm_to_vmem [thread:$0]  %s0, 128, %s17, [#allocation3]
    $region5: #{tpu_custom_call.1} parent=1 // pred_fallthru
      _
    // Predicated region
    $region6: #{tpu_custom_call.1} parent=1 // pred_check
      _
    $region7: #{tpu_custom_call.1} parent=1 // pred_check_branch
      %21 = sbr.rel (0) target = $region9
    $region8: #{tpu_custom_call.1} parent=1 // pred_region
      %s23 = ssub.s32 128, 128
      %24 = vsyncadd [#allocation6], %s23
      %s26 = sshll.u32 [#allocation5], 4
      %s27 = int_to_ptr.vmem [resolvable:$true] %s26
      %29 = dma.hbm_to_vmem [thread:$0]  %s1, 128, %s27, [#allocation6]
    $region9: #{tpu_custom_call.1} parent=1 // pred_fallthru
      _
    // Predicated region
    $region10: #{tpu_custom_call.1} parent=1 // pred_check
      _
    $region11: #{tpu_custom_call.1} parent=1 // pred_check_branch
      %31 = sbr.rel (0) target = $region13
    $region12: #{tpu_custom_call.1} parent=1 // pred_region
      %32 = dma.done [#allocation3], 128
    $region13: #{tpu_custom_call.1} parent=1 // pred_fallthru
      _
    // Predicated region
    $region14: #{tpu_custom_call.1} parent=1 // pred_check
      _
    $region15: #{tpu_custom_call.1} parent=1 // pred_check_branch
      %34 = sbr.rel (0) target = $region17
    $region16: #{tpu_custom_call.1} parent=1 // pred_region
      %35 = dma.done [#allocation6], 128
    $region17: #{tpu_custom_call.1} parent=1 // pred_fallthru
      _
    %s36 = smul.u32 0, 8
    %v37 = vld [vmem:[#allocation2] sm:$0xff]
    %v38 = vld [vmem:[#allocation5] sm:$0xff]
    %s39 = scalar_lea.vmem [#allocation2], %s36
    %v40 = vld [vmem:[%s39] sm:$0xff]
    %s41 = scalar_lea.vmem [#allocation5], %s36
    %v42 = vld [vmem:[%s41] sm:$0xff]
    %v43 = vlaneseq
    %v44 = vshrl.u32 %v43, 7
    %v45 = vstv %s36
    %v46 = vadd.s32 %v45, %v44
    %v47 = vlaneseq
    %v48 = vand.u32 %v47, 127
    %vm49 = vcmp.eq.s32.totalorder %v46, %v48
    %v50 = vmul.f32 %v40, %v42
    %51 = vadd.xlane.f32.xlu0 %v50
    %v52 = vpop.xlane.xlu0 %51
    %53 = vmatprep.subr.mxu0 0.0
    %54 = vmatpush1.xpose.msra.mxu0 %v38
    %55 = vmatprep.subr.mxu0 0.0
    %56 = vmatpush1.xpose.msra.mxu0 0.0
    %57 = vmatprep.subr.mxu0 0.0
    %58 = vmatpush1.xpose.msra.mxu0 0.0
    %59 = vmatprep.subr.mxu0 0.0
    %60 = vmatpush1.xpose.msra.mxu0 0.0
    %61 = vmatprep.subr.mxu0 0.0
    %62 = vmatpush1.xpose.msra.mxu0 0.0
    %63 = vmatprep.subr.mxu0 0.0
    %64 = vmatpush1.xpose.msra.mxu0 0.0
    %65 = vmatprep.subr.mxu0 0.0
    %66 = vmatpush1.xpose.msra.mxu0 0.0
    %67 = vmatprep.subr.mxu0 0.0
    %68 = vmatpush1.xpose.msra.mxu0 0.0
    %69 = vmatprep.subr.mxu0 0.0
    %70 = vmatpush1.xpose.msra.mxu0 0.0
    %71 = vmatprep.subr.mxu0 0.0
    %72 = vmatpush1.xpose.msra.mxu0 0.0
    %73 = vmatprep.subr.mxu0 0.0
    %74 = vmatpush1.xpose.msra.mxu0 0.0
    %75 = vmatprep.subr.mxu0 0.0
    %76 = vmatpush1.xpose.msra.mxu0 0.0
    %77 = vmatprep.subr.mxu0 0.0
    %78 = vmatpush1.xpose.msra.mxu0 0.0
    %79 = vmatprep.subr.mxu0 0.0
    %80 = vmatpush1.xpose.msra.mxu0 0.0
    %81 = vmatprep.subr.mxu0 0.0
    %82 = vmatpush1.xpose.msra.mxu0 0.0
    %83 = vmatprep.subr.mxu0 0.0
    %84 = vmatpush1.xpose.msra.mxu0 0.0
    %85 = vmatprep.subr.mxu0 0.0
    %86 = vmatpush1.xpose.msra.mxu0 0.0
    %87 = vmatprep.subr.mxu0 0.0
    %88 = vmatpush1.xpose.msra.mxu0 0.0
    %89 = vmatprep.subr.mxu0 0.0
    %90 = vmatpush1.xpose.msra.mxu0 0.0
    %91 = vmatprep.subr.mxu0 0.0
    %92 = vmatpush1.xpose.msra.mxu0 0.0
    %93 = vmatprep.subr.mxu0 0.0
    %94 = vmatpush1.xpose.msra.mxu0 0.0
    %95 = vmatprep.subr.mxu0 0.0
    %96 = vmatpush1.xpose.msra.mxu0 0.0
    %97 = vmatprep.subr.mxu0 0.0
    %98 = vmatpush1.xpose.msra.mxu0 0.0
    %99 = vmatprep.subr.mxu0 0.0
    %100 = vmatpush1.xpose.msra.mxu0 0.0
    %101 = vmatprep.subr.mxu0 0.0
    %102 = vmatpush1.xpose.msra.mxu0 0.0
    %103 = vmatprep.subr.mxu0 0.0
    %104 = vmatpush1.xpose.msra.mxu0 0.0
    %105 = vmatprep.subr.mxu0 0.0
    %106 = vmatpush1.xpose.msra.mxu0 0.0
    %107 = vmatprep.subr.mxu0 0.0
    %108 = vmatpush1.xpose.msra.mxu0 0.0
    %109 = vmatprep.subr.mxu0 0.0
    %110 = vmatpush1.xpose.msra.mxu0 0.0
    %111 = vmatprep.subr.mxu0 0.0
    %112 = vmatpush1.xpose.msra.mxu0 0.0
    %113 = vmatprep.subr.mxu0 0.0
    %114 = vmatpush1.xpose.msra.mxu0 0.0
    %115 = vmatprep.subr.mxu0 0.0
    %116 = vmatpush1.xpose.msra.mxu0 0.0
    %117 = vmatprep.mubr.f32.mxu0 0.0
    %118 = vmatmul.mubr.f32.gmra.mrb[0].mxu0 %v40
    %v119 = vpop.f32.mrb[0].mxu0
    %v120 = vadd.f32 0.0, %v119
    %v121 = vpop.f32.mrb[0].mxu0
    %122 = vdwg.mxu0
    %123 = vmatprep.subr.mxu0 0.0
    %124 = vmatpush1.xpose.msra.mxu0 %v37
    %125 = vmatprep.subr.mxu0 0.0
    %126 = vmatpush1.xpose.msra.mxu0 0.0
    %127 = vmatprep.subr.mxu0 0.0
    %128 = vmatpush1.xpose.msra.mxu0 0.0
    %129 = vmatprep.subr.mxu0 0.0
    %130 = vmatpush1.xpose.msra.mxu0 0.0
    %131 = vmatprep.subr.mxu0 0.0
    %132 = vmatpush1.xpose.msra.mxu0 0.0
    %133 = vmatprep.subr.mxu0 0.0
    %134 = vmatpush1.xpose.msra.mxu0 0.0
    %135 = vmatprep.subr.mxu0 0.0
    %136 = vmatpush1.xpose.msra.mxu0 0.0
    %137 = vmatprep.subr.mxu0 0.0
    %138 = vmatpush1.xpose.msra.mxu0 0.0
    %139 = vmatprep.subr.mxu0 0.0
    %140 = vmatpush1.xpose.msra.mxu0 0.0
    %141 = vmatprep.subr.mxu0 0.0
    %142 = vmatpush1.xpose.msra.mxu0 0.0
    %143 = vmatprep.subr.mxu0 0.0
    %144 = vmatpush1.xpose.msra.mxu0 0.0
    %145 = vmatprep.subr.mxu0 0.0
    %146 = vmatpush1.xpose.msra.mxu0 0.0
    %147 = vmatprep.subr.mxu0 0.0
    %148 = vmatpush1.xpose.msra.mxu0 0.0
    %149 = vmatprep.subr.mxu0 0.0
    %150 = vmatpush1.xpose.msra.mxu0 0.0
    %151 = vmatprep.subr.mxu0 0.0
    %152 = vmatpush1.xpose.msra.mxu0 0.0
    %153 = vmatprep.subr.mxu0 0.0
    %154 = vmatpush1.xpose.msra.mxu0 0.0
    %155 = vmatprep.subr.mxu0 0.0
    %156 = vmatpush1.xpose.msra.mxu0 0.0
    %157 = vmatprep.subr.mxu0 0.0
    %158 = vmatpush1.xpose.msra.mxu0 0.0
    %159 = vmatprep.subr.mxu0 0.0
    %160 = vmatpush1.xpose.msra.mxu0 0.0
    %161 = vmatprep.subr.mxu0 0.0
    %162 = vmatpush1.xpose.msra.mxu0 0.0
    %163 = vmatprep.subr.mxu0 0.0
    %164 = vmatpush1.xpose.msra.mxu0 0.0
    %165 = vmatprep.subr.mxu0 0.0
    %166 = vmatpush1.xpose.msra.mxu0 0.0
    %167 = vmatprep.subr.mxu0 0.0
    %168 = vmatpush1.xpose.msra.mxu0 0.0
    %169 = vmatprep.subr.mxu0 0.0
    %170 = vmatpush1.xpose.msra.mxu0 0.0
    %171 = vmatprep.subr.mxu0 0.0
    %172 = vmatpush1.xpose.msra.mxu0 0.0
    %173 = vmatprep.subr.mxu0 0.0
    %174 = vmatpush1.xpose.msra.mxu0 0.0
    %175 = vmatprep.subr.mxu0 0.0
    %176 = vmatpush1.xpose.msra.mxu0 0.0
    %177 = vmatprep.subr.mxu0 0.0
    %178 = vmatpush1.xpose.msra.mxu0 0.0
    %179 = vmatprep.subr.mxu0 0.0
    %180 = vmatpush1.xpose.msra.mxu0 0.0
    %181 = vmatprep.subr.mxu0 0.0
    %182 = vmatpush1.xpose.msra.mxu0 0.0
    %183 = vmatprep.subr.mxu0 0.0
    %184 = vmatpush1.xpose.msra.mxu0 0.0
    %185 = vmatprep.subr.mxu0 0.0
    %186 = vmatpush1.xpose.msra.mxu0 0.0
    %187 = vmatprep.mubr.f32.mxu0 0.0
    %188 = vmatmul.mubr.f32.gmra.mrb[0].mxu0 %v40
    %v189 = vpop.f32.mrb[0].mxu0
    %v190 = vadd.f32 0.0, %v189
    %v191 = vpop.f32.mrb[0].mxu0
    %192 = vdwg.mxu0
    %v193 = vmul.f32 %v190, 0.8
    %v194 = vsel %vm49, 0.0, %v193
    %vm195 = vcmask 64512
    %v196 = vsel %vm195, %v120, -inf
    %197 = vmax.xlane.f32.xlu0 %v196
    %v198 = vpop.xlane.xlu0 %197
    %v199 = vsel %vm195, %v194, -inf
    %200 = vmax.xlane.f32.xlu0 %v199
    %v201 = vpop.xlane.xlu0 %200
    %v202 = vmax.f32 %v198, %v201
    %v203 = vsub.f32 %v120, %v202
    %v204 = vmul.f32 %v203, 1.442695
    %v205 = vpow.pop %v204
    %v206 = vsel %vm195, %v205, 0.0
    %207 = vadd.xlane.f32.xlu0 %v206
    %v208 = vpop.xlane.xlu0 %207
    %v209 = vsub.f32 %v194, %v202
    %v210 = vmul.f32 %v209, 1.442695
    %v211 = vpow.pop %v210
    %v212 = vsel %vm195, %v211, 0.0
    %213 = vadd.xlane.f32.xlu0 %v212
    %v214 = vpop.xlane.xlu0 %213
    %v215 = vadd.f32 %v208, %v214
    %v216 = vlog2.pop %v215
    %v217 = vmul.f32 %v216, 0.6931472
    %v218 = vadd.f32 %v217, %v202
    %v219 = vsub.f32 %v218, %v52
    %220 = vmatprep.subr.mxu0 0.0
    %221 = vmatpush1.xpose.msra.mxu0 %v37
    %222 = vmatprep.subr.mxu0 0.0
    %223 = vmatpush1.xpose.msra.mxu0 0.0
    %224 = vmatprep.subr.mxu0 0.0
    %225 = vmatpush1.xpose.msra.mxu0 0.0
    %226 = vmatprep.subr.mxu0 0.0
    %227 = vmatpush1.xpose.msra.mxu0 0.0
    %228 = vmatprep.subr.mxu0 0.0
    %229 = vmatpush1.xpose.msra.mxu0 0.0
    %230 = vmatprep.subr.mxu0 0.0
    %231 = vmatpush1.xpose.msra.mxu0 0.0
    %232 = vmatprep.subr.mxu0 0.0
    %233 = vmatpush1.xpose.msra.mxu0 0.0
    %234 = vmatprep.subr.mxu0 0.0
    %235 = vmatpush1.xpose.msra.mxu0 0.0
    %236 = vmatprep.subr.mxu0 0.0
    %237 = vmatpush1.xpose.msra.mxu0 0.0
    %238 = vmatprep.subr.mxu0 0.0
    %239 = vmatpush1.xpose.msra.mxu0 0.0
    %240 = vmatprep.subr.mxu0 0.0
    %241 = vmatpush1.xpose.msra.mxu0 0.0
    %242 = vmatprep.subr.mxu0 0.0
    %243 = vmatpush1.xpose.msra.mxu0 0.0
    %244 = vmatprep.subr.mxu0 0.0
    %245 = vmatpush1.xpose.msra.mxu0 0.0
    %246 = vmatprep.subr.mxu0 0.0
    %247 = vmatpush1.xpose.msra.mxu0 0.0
    %248 = vmatprep.subr.mxu0 0.0
    %249 = vmatpush1.xpose.msra.mxu0 0.0
    %250 = vmatprep.subr.mxu0 0.0
    %251 = vmatpush1.xpose.msra.mxu0 0.0
    %252 = vmatprep.subr.mxu0 0.0
    %253 = vmatpush1.xpose.msra.mxu0 0.0
    %254 = vmatprep.subr.mxu0 0.0
    %255 = vmatpush1.xpose.msra.mxu0 0.0
    %256 = vmatprep.subr.mxu0 0.0
    %257 = vmatpush1.xpose.msra.mxu0 0.0
    %258 = vmatprep.subr.mxu0 0.0
    %259 = vmatpush1.xpose.msra.mxu0 0.0
    %260 = vmatprep.subr.mxu0 0.0
    %261 = vmatpush1.xpose.msra.mxu0 0.0
    %262 = vmatprep.subr.mxu0 0.0
    %263 = vmatpush1.xpose.msra.mxu0 0.0
    %264 = vmatprep.subr.mxu0 0.0
    %265 = vmatpush1.xpose.msra.mxu0 0.0
    %266 = vmatprep.subr.mxu0 0.0
    %267 = vmatpush1.xpose.msra.mxu0 0.0
    %268 = vmatprep.subr.mxu0 0.0
    %269 = vmatpush1.xpose.msra.mxu0 0.0
    %270 = vmatprep.subr.mxu0 0.0
    %271 = vmatpush1.xpose.msra.mxu0 0.0
    %272 = vmatprep.subr.mxu0 0.0
    %273 = vmatpush1.xpose.msra.mxu0 0.0
    %274 = vmatprep.subr.mxu0 0.0
    %275 = vmatpush1.xpose.msra.mxu0 0.0
    %276 = vmatprep.subr.mxu0 0.0
    %277 = vmatpush1.xpose.msra.mxu0 0.0
    %278 = vmatprep.subr.mxu0 0.0
    %279 = vmatpush1.xpose.msra.mxu0 0.0
    %280 = vmatprep.subr.mxu0 0.0
    %281 = vmatpush1.xpose.msra.mxu0 0.0
    %282 = vmatprep.subr.mxu0 0.0
    %283 = vmatpush1.xpose.msra.mxu0 0.0
    %284 = vmatprep.mubr.f32.mxu0 0.0
    %285 = vmatmul.mubr.f32.gmra.mrb[0].mxu0 %v42
    %v286 = vpop.f32.mrb[0].mxu0
    %v287 = vadd.f32 0.0, %v286
    %v288 = vpop.f32.mrb[0].mxu0
    %289 = vdwg.mxu0
    %290 = vmatprep.subr.mxu0 0.0
    %291 = vmatpush1.xpose.msra.mxu0 %v38
    %292 = vmatprep.subr.mxu0 0.0
    %293 = vmatpush1.xpose.msra.mxu0 0.0
    %294 = vmatprep.subr.mxu0 0.0
    %295 = vmatpush1.xpose.msra.mxu0 0.0
    %296 = vmatprep.subr.mxu0 0.0
    %297 = vmatpush1.xpose.msra.mxu0 0.0
    %298 = vmatprep.subr.mxu0 0.0
    %299 = vmatpush1.xpose.msra.mxu0 0.0
    %300 = vmatprep.subr.mxu0 0.0
    %301 = vmatpush1.xpose.msra.mxu0 0.0
    %302 = vmatprep.subr.mxu0 0.0
    %303 = vmatpush1.xpose.msra.mxu0 0.0
    %304 = vmatprep.subr.mxu0 0.0
    %305 = vmatpush1.xpose.msra.mxu0 0.0
    %306 = vmatprep.subr.mxu0 0.0
    %307 = vmatpush1.xpose.msra.mxu0 0.0
    %308 = vmatprep.subr.mxu0 0.0
    %309 = vmatpush1.xpose.msra.mxu0 0.0
    %310 = vmatprep.subr.mxu0 0.0
    %311 = vmatpush1.xpose.msra.mxu0 0.0
    %312 = vmatprep.subr.mxu0 0.0
    %313 = vmatpush1.xpose.msra.mxu0 0.0
    %314 = vmatprep.subr.mxu0 0.0
    %315 = vmatpush1.xpose.msra.mxu0 0.0
    %316 = vmatprep.subr.mxu0 0.0
    %317 = vmatpush1.xpose.msra.mxu0 0.0
    %318 = vmatprep.subr.mxu0 0.0
    %319 = vmatpush1.xpose.msra.mxu0 0.0
    %320 = vmatprep.subr.mxu0 0.0
    %321 = vmatpush1.xpose.msra.mxu0 0.0
    %322 = vmatprep.subr.mxu0 0.0
    %323 = vmatpush1.xpose.msra.mxu0 0.0
    %324 = vmatprep.subr.mxu0 0.0
    %325 = vmatpush1.xpose.msra.mxu0 0.0
    %326 = vmatprep.subr.mxu0 0.0
    %327 = vmatpush1.xpose.msra.mxu0 0.0
    %328 = vmatprep.subr.mxu0 0.0
    %329 = vmatpush1.xpose.msra.mxu0 0.0
    %330 = vmatprep.subr.mxu0 0.0
    %331 = vmatpush1.xpose.msra.mxu0 0.0
    %332 = vmatprep.subr.mxu0 0.0
    %333 = vmatpush1.xpose.msra.mxu0 0.0
    %334 = vmatprep.subr.mxu0 0.0
    %335 = vmatpush1.xpose.msra.mxu0 0.0
    %336 = vmatprep.subr.mxu0 0.0
    %337 = vmatpush1.xpose.msra.mxu0 0.0
    %338 = vmatprep.subr.mxu0 0.0
    %339 = vmatpush1.xpose.msra.mxu0 0.0
    %340 = vmatprep.subr.mxu0 0.0
    %341 = vmatpush1.xpose.msra.mxu0 0.0
    %342 = vmatprep.subr.mxu0 0.0
    %343 = vmatpush1.xpose.msra.mxu0 0.0
    %344 = vmatprep.subr.mxu0 0.0
    %345 = vmatpush1.xpose.msra.mxu0 0.0
    %346 = vmatprep.subr.mxu0 0.0
    %347 = vmatpush1.xpose.msra.mxu0 0.0
    %348 = vmatprep.subr.mxu0 0.0
    %349 = vmatpush1.xpose.msra.mxu0 0.0
    %350 = vmatprep.subr.mxu0 0.0
    %351 = vmatpush1.xpose.msra.mxu0 0.0
    %352 = vmatprep.subr.mxu0 0.0
    %353 = vmatpush1.xpose.msra.mxu0 0.0
    %354 = vmatprep.mubr.f32.mxu0 0.0
    %355 = vmatmul.mubr.f32.gmra.mrb[0].mxu0 %v42
    %v356 = vpop.f32.mrb[0].mxu0
    %v357 = vadd.f32 0.0, %v356
    %v358 = vpop.f32.mrb[0].mxu0
    %359 = vdwg.mxu0
    %v360 = vmul.f32 %v357, 0.8
    %v361 = vsel %vm49, 0.0, %v360
    %v362 = vsel %vm195, %v287, -inf
    %363 = vmax.xlane.f32.xlu0 %v362
    %v364 = vpop.xlane.xlu0 %363
    %v365 = vsel %vm195, %v361, -inf
    %366 = vmax.xlane.f32.xlu0 %v365
    %v367 = vpop.xlane.xlu0 %366
    %v368 = vmax.f32 %v364, %v367
    %v369 = vsub.f32 %v287, %v368
    %v370 = vmul.f32 %v369, 1.442695
    %v371 = vpow.pop %v370
    %v372 = vsel %vm195, %v371, 0.0
    %373 = vadd.xlane.f32.xlu0 %v372
    %v374 = vpop.xlane.xlu0 %373
    %v375 = vsub.f32 %v361, %v368
    %v376 = vmul.f32 %v375, 1.442695
    %v377 = vpow.pop %v376
    %v378 = vsel %vm195, %v377, 0.0
    %379 = vadd.xlane.f32.xlu0 %v378
    %v380 = vpop.xlane.xlu0 %379
    %v381 = vadd.f32 %v374, %v380
    %v382 = vlog2.pop %v381
    %v383 = vmul.f32 %v382, 0.6931472
    %v384 = vadd.f32 %v383, %v368
    %v385 = vsub.f32 %v384, %v52
    %vm386 = vcmask 7168
    %v387 = vsel %vm386, %v219, 0.0
    %388 = vadd.xlane.f32.xlu0 %v387
    %v389 = vpop.xlane.xlu0 %388
    %v390 = vrot.slane %v389, 4
    %v391 = vadd.f32 %v389, %v390
    %v392 = vrot.slane %v391, 2
    %v393 = vadd.f32 %v391, %v392
    %v394 = vrot.slane %v393, 1
    %v395 = vadd.f32 %v393, %v394
    %s396 = vtos %v395
    %v397 = vsel %vm386, %v385, 0.0
    %398 = vadd.xlane.f32.xlu0 %v397
    %v399 = vpop.xlane.xlu0 %398
    %v400 = vrot.slane %v399, 4
    %v401 = vadd.f32 %v399, %v400
    %v402 = vrot.slane %v401, 2
    %v403 = vadd.f32 %v401, %v402
    %v404 = vrot.slane %v403, 1
    %v405 = vadd.f32 %v403, %v404
    %s406 = vtos %v405
    %s407 = sadd.f32 %s396, %s406
    %v408 = vstv %s407
    %v409 = vadd.f32 %v408, 0.0
    %410 = vst [vmem:[#allocation7] sm:$0xff] %v409
    // Predicated region
    $region18: #{tpu_custom_call.1} parent=1 // pred_check
      _
    $region19: #{tpu_custom_call.1} parent=1 // pred_check_branch
      %412 = sbr.rel (0) target = $region21
    $region20: #{tpu_custom_call.1} parent=1 // pred_region
      %s414 = ssub.s32 128, 128
      %415 = vsyncadd [#allocation4], %s414
      %s417 = sshll.u32 [#allocation7], 4
      %s418 = int_to_ptr.vmem [resolvable:$true] %s417
      %420 = dma.vmem_to_hbm [thread:$0]  %s418, 128, %s2, [#allocation4]
    $region21: #{tpu_custom_call.1} parent=1 // pred_fallthru
      _
    // Predicated region
    $region22: #{tpu_custom_call.1} parent=1 // pred_check
      _
    $region23: #{tpu_custom_call.1} parent=1 // pred_check_branch
      %422 = sbr.rel (0) target = $region25
    $region24: #{tpu_custom_call.1} parent=1 // pred_region
      %423 = dma.done [#allocation4], 128
    $region25: #{tpu_custom_call.1} parent=1 // pred_fallthru
      _
    %424 = vsyncpa [#allocation3], 1
    %425 = vsyncpa [#allocation6], 1
    %426 = vsyncpa [#allocation4], 1

// kernel: tpu_custom_call.1
$region0: #{tpu_custom_call.1}
  #allocation0 [shape = 'u32[]', space=smem, size = 0x4, offset = 0x4, fixed_abs, tag = 'smem constant byte address 0x4 - core index']
  #allocation1 [shape = 'u32[144,128]{1,0:T(1,128)}', space=vmem, size = 0x12000, scoped, tag = 'internal scratch']
  %s0 = inlined_call_operand.hbm [shape: f32[8,128], index: 0, kind: input, shape index: {}]
  %s1 = inlined_call_operand.hbm [shape: f32[8,128], index: 1, kind: input, shape index: {}]
  %s2 = inlined_call_operand.hbm [shape: f32[1,8,128], index: 2, kind: output, shape index: {}]
  %s3 = sld [smem:[#allocation0]]
  $region26: #{tpu_custom_call.1} parent=0
    _
  %s5 = ssub.s32 1, %s3
  %s6 = scalar_select 0, %s5, %s3
  $region1: #{tpu_custom_call.1} parent=0
    #allocation2 [shape = 'u8[4096]{0}', space=vmem, size = 0x1000, scoped, tag = 'input window, operand 0, single buffered']
    #allocation3 [shape = 's32[1]{0}', space=sflag, size = 0x4, scoped, tag = 'scoped memory for tpu_custom_call.1']
    #allocation4 [shape = 's32[1]{0}', space=sflag, size = 0x4, scoped, tag = 'scoped memory for tpu_custom_call.1']
    #allocation5 [shape = 'u8[4096]{0}', space=vmem, size = 0x1000, scoped, tag = 'input window, operand 1, single buffered']
    #allocation6 [shape = 's32[1]{0}', space=sflag, size = 0x4, scoped, tag = 'scoped memory for tpu_custom_call.1']
    #allocation7 [shape = 'u8[4096]{0}', space=vmem, size = 0x1000, scoped, tag = 'output window, operand 0, single buffered']
    %7 = vsyncpa [#allocation3], 0
    %8 = vsyncpa [#allocation6], 0
    %9 = vsyncpa [#allocation4], 0
    // Predicated region
    $region2: #{tpu_custom_call.1} parent=1 // pred_check
      _
    $region3: #{tpu_custom_call.1} parent=1 // pred_check_branch
      %11 = sbr.rel (0) target = $region5
    $region4: #{tpu_custom_call.1} parent=1 // pred_region
      %s13 = ssub.s32 128, 128
      %14 = vsyncadd [#allocation3], %s13
      %s16 = sshll.u32 [#allocation2], 4
      %s17 = int_to_ptr.vmem [resolvable:$true] %s16
      %19 = dma.hbm_to_vmem [thread:$0]  %s0, 128, %s17, [#allocation3]
    $region5: #{tpu_custom_call.1} parent=1 // pred_fallthru
      _
    // Predicated region
    $region6: #{tpu_custom_call.1} parent=1 // pred_check
      _
    $region7: #{tpu_custom_call.1} parent=1 // pred_check_branch
      %21 = sbr.rel (0) target = $region9
    $region8: #{tpu_custom_call.1} parent=1 // pred_region
      %s23 = ssub.s32 128, 128
      %24 = vsyncadd [#allocation6], %s23
      %s26 = sshll.u32 [#allocation5], 4
      %s27 = int_to_ptr.vmem [resolvable:$true] %s26
      %29 = dma.hbm_to_vmem [thread:$0]  %s1, 128, %s27, [#allocation6]
    $region9: #{tpu_custom_call.1} parent=1 // pred_fallthru
      _
    // Predicated region
    $region10: #{tpu_custom_call.1} parent=1 // pred_check
      _
    $region11: #{tpu_custom_call.1} parent=1 // pred_check_branch
      %31 = sbr.rel (0) target = $region13
    $region12: #{tpu_custom_call.1} parent=1 // pred_region
      %32 = dma.done [#allocation3], 128
    $region13: #{tpu_custom_call.1} parent=1 // pred_fallthru
      _
    // Predicated region
    $region14: #{tpu_custom_call.1} parent=1 // pred_check
      _
    $region15: #{tpu_custom_call.1} parent=1 // pred_check_branch
      %34 = sbr.rel (0) target = $region17
    $region16: #{tpu_custom_call.1} parent=1 // pred_region
      %35 = dma.done [#allocation6], 128
    $region17: #{tpu_custom_call.1} parent=1 // pred_fallthru
      _
    %s36 = smul.u32 0, 8
    %v37 = vld [vmem:[#allocation2] sm:$0xff]
    %v38 = vld [vmem:[#allocation5] sm:$0xff]
    %s39 = scalar_lea.vmem [#allocation2], %s36
    %v40 = vld [vmem:[%s39] sm:$0xff]
    %s41 = scalar_lea.vmem [#allocation5], %s36
    %v42 = vld [vmem:[%s41] sm:$0xff]
    %v43 = vlaneseq
    %v44 = vshrl.u32 %v43, 7
    %v45 = vstv %s36
    %v46 = vadd.s32 %v45, %v44
    %v47 = vlaneseq
    %v48 = vand.u32 %v47, 127
    %vm49 = vcmp.eq.s32.totalorder %v46, %v48
    %v50 = vmul.f32 %v40, %v42
    %51 = vadd.xlane.f32.xlu0 %v50
    %v52 = vpop.xlane.xlu0 %51
    %53 = vmatprep.subr.mxu0 0.0
    %54 = vmatpush1.xpose.msra.mxu0 %v38
    %55 = vmatprep.subr.mxu0 0.0
    %56 = vmatpush1.xpose.msra.mxu0 0.0
    %57 = vmatprep.subr.mxu0 0.0
    %58 = vmatpush1.xpose.msra.mxu0 0.0
    %59 = vmatprep.subr.mxu0 0.0
    %60 = vmatpush1.xpose.msra.mxu0 0.0
    %61 = vmatprep.subr.mxu0 0.0
    %62 = vmatpush1.xpose.msra.mxu0 0.0
    %63 = vmatprep.subr.mxu0 0.0
    %64 = vmatpush1.xpose.msra.mxu0 0.0
    %65 = vmatprep.subr.mxu0 0.0
    %66 = vmatpush1.xpose.msra.mxu0 0.0
    %67 = vmatprep.subr.mxu0 0.0
    %68 = vmatpush1.xpose.msra.mxu0 0.0
    %69 = vmatprep.subr.mxu0 0.0
    %70 = vmatpush1.xpose.msra.mxu0 0.0
    %71 = vmatprep.subr.mxu0 0.0
    %72 = vmatpush1.xpose.msra.mxu0 0.0
    %73 = vmatprep.subr.mxu0 0.0
    %74 = vmatpush1.xpose.msra.mxu0 0.0
    %75 = vmatprep.subr.mxu0 0.0
    %76 = vmatpush1.xpose.msra.mxu0 0.0
    %77 = vmatprep.subr.mxu0 0.0
    %78 = vmatpush1.xpose.msra.mxu0 0.0
    %79 = vmatprep.subr.mxu0 0.0
    %80 = vmatpush1.xpose.msra.mxu0 0.0
    %81 = vmatprep.subr.mxu0 0.0
    %82 = vmatpush1.xpose.msra.mxu0 0.0
    %83 = vmatprep.subr.mxu0 0.0
    %84 = vmatpush1.xpose.msra.mxu0 0.0
    %85 = vmatprep.subr.mxu0 0.0
    %86 = vmatpush1.xpose.msra.mxu0 0.0
    %87 = vmatprep.subr.mxu0 0.0
    %88 = vmatpush1.xpose.msra.mxu0 0.0
    %89 = vmatprep.subr.mxu0 0.0
    %90 = vmatpush1.xpose.msra.mxu0 0.0
    %91 = vmatprep.subr.mxu0 0.0
    %92 = vmatpush1.xpose.msra.mxu0 0.0
    %93 = vmatprep.subr.mxu0 0.0
    %94 = vmatpush1.xpose.msra.mxu0 0.0
    %95 = vmatprep.subr.mxu0 0.0
    %96 = vmatpush1.xpose.msra.mxu0 0.0
    %97 = vmatprep.subr.mxu0 0.0
    %98 = vmatpush1.xpose.msra.mxu0 0.0
    %99 = vmatprep.subr.mxu0 0.0
    %100 = vmatpush1.xpose.msra.mxu0 0.0
    %101 = vmatprep.subr.mxu0 0.0
    %102 = vmatpush1.xpose.msra.mxu0 0.0
    %103 = vmatprep.subr.mxu0 0.0
    %104 = vmatpush1.xpose.msra.mxu0 0.0
    %105 = vmatprep.subr.mxu0 0.0
    %106 = vmatpush1.xpose.msra.mxu0 0.0
    %107 = vmatprep.subr.mxu0 0.0
    %108 = vmatpush1.xpose.msra.mxu0 0.0
    %109 = vmatprep.subr.mxu0 0.0
    %110 = vmatpush1.xpose.msra.mxu0 0.0
    %111 = vmatprep.subr.mxu0 0.0
    %112 = vmatpush1.xpose.msra.mxu0 0.0
    %113 = vmatprep.subr.mxu0 0.0
    %114 = vmatpush1.xpose.msra.mxu0 0.0
    %115 = vmatprep.subr.mxu0 0.0
    %116 = vmatpush1.xpose.msra.mxu0 0.0
    %117 = vmatprep.mubr.f32.mxu0 0.0
    %118 = vmatmul.mubr.f32.gmra.mrb[0].mxu0 %v40
    %v119 = vpop.f32.mrb[0].mxu0
    %v120 = vadd.f32 0.0, %v119
    %v121 = vpop.f32.mrb[0].mxu0
    %122 = vdwg.mxu0
    %123 = vmatprep.subr.mxu0 0.0
    %124 = vmatpush1.xpose.msra.mxu0 %v37
    %125 = vmatprep.subr.mxu0 0.0
    %126 = vmatpush1.xpose.msra.mxu0 0.0
    %127 = vmatprep.subr.mxu0 0.0
    %128 = vmatpush1.xpose.msra.mxu0 0.0
    %129 = vmatprep.subr.mxu0 0.0
    %130 = vmatpush1.xpose.msra.mxu0 0.0
    %131 = vmatprep.subr.mxu0 0.0
    %132 = vmatpush1.xpose.msra.mxu0 0.0
    %133 = vmatprep.subr.mxu0 0.0
    %134 = vmatpush1.xpose.msra.mxu0 0.0
    %135 = vmatprep.subr.mxu0 0.0
    %136 = vmatpush1.xpose.msra.mxu0 0.0
    %137 = vmatprep.subr.mxu0 0.0
    %138 = vmatpush1.xpose.msra.mxu0 0.0
    %139 = vmatprep.subr.mxu0 0.0
    %140 = vmatpush1.xpose.msra.mxu0 0.0
    %141 = vmatprep.subr.mxu0 0.0
    %142 = vmatpush1.xpose.msra.mxu0 0.0
    %143 = vmatprep.subr.mxu0 0.0
    %144 = vmatpush1.xpose.msra.mxu0 0.0
    %145 = vmatprep.subr.mxu0 0.0
    %146 = vmatpush1.xpose.msra.mxu0 0.0
    %147 = vmatprep.subr.mxu0 0.0
    %148 = vmatpush1.xpose.msra.mxu0 0.0
    %149 = vmatprep.subr.mxu0 0.0
    %150 = vmatpush1.xpose.msra.mxu0 0.0
    %151 = vmatprep.subr.mxu0 0.0
    %152 = vmatpush1.xpose.msra.mxu0 0.0
    %153 = vmatprep.subr.mxu0 0.0
    %154 = vmatpush1.xpose.msra.mxu0 0.0
    %155 = vmatprep.subr.mxu0 0.0
    %156 = vmatpush1.xpose.msra.mxu0 0.0
    %157 = vmatprep.subr.mxu0 0.0
    %158 = vmatpush1.xpose.msra.mxu0 0.0
    %159 = vmatprep.subr.mxu0 0.0
    %160 = vmatpush1.xpose.msra.mxu0 0.0
    %161 = vmatprep.subr.mxu0 0.0
    %162 = vmatpush1.xpose.msra.mxu0 0.0
    %163 = vmatprep.subr.mxu0 0.0
    %164 = vmatpush1.xpose.msra.mxu0 0.0
    %165 = vmatprep.subr.mxu0 0.0
    %166 = vmatpush1.xpose.msra.mxu0 0.0
    %167 = vmatprep.subr.mxu0 0.0
    %168 = vmatpush1.xpose.msra.mxu0 0.0
    %169 = vmatprep.subr.mxu0 0.0
    %170 = vmatpush1.xpose.msra.mxu0 0.0
    %171 = vmatprep.subr.mxu0 0.0
    %172 = vmatpush1.xpose.msra.mxu0 0.0
    %173 = vmatprep.subr.mxu0 0.0
    %174 = vmatpush1.xpose.msra.mxu0 0.0
    %175 = vmatprep.subr.mxu0 0.0
    %176 = vmatpush1.xpose.msra.mxu0 0.0
    %177 = vmatprep.subr.mxu0 0.0
    %178 = vmatpush1.xpose.msra.mxu0 0.0
    %179 = vmatprep.subr.mxu0 0.0
    %180 = vmatpush1.xpose.msra.mxu0 0.0
    %181 = vmatprep.subr.mxu0 0.0
    %182 = vmatpush1.xpose.msra.mxu0 0.0
    %183 = vmatprep.subr.mxu0 0.0
    %184 = vmatpush1.xpose.msra.mxu0 0.0
    %185 = vmatprep.subr.mxu0 0.0
    %186 = vmatpush1.xpose.msra.mxu0 0.0
    %187 = vmatprep.mubr.f32.mxu0 0.0
    %188 = vmatmul.mubr.f32.gmra.mrb[0].mxu0 %v40
    %v189 = vpop.f32.mrb[0].mxu0
    %v190 = vadd.f32 0.0, %v189
    %v191 = vpop.f32.mrb[0].mxu0
    %192 = vdwg.mxu0
    %v193 = vmul.f32 %v190, 0.8
    %v194 = vsel %vm49, 0.0, %v193
    %vm195 = vcmask 64512
    %v196 = vsel %vm195, %v120, -inf
    %197 = vmax.xlane.f32.xlu0 %v196
    %v198 = vpop.xlane.xlu0 %197
    %v199 = vsel %vm195, %v194, -inf
    %200 = vmax.xlane.f32.xlu0 %v199
    %v201 = vpop.xlane.xlu0 %200
    %v202 = vmax.f32 %v198, %v201
    %v203 = vsub.f32 %v120, %v202
    %v204 = vmul.f32 %v203, 1.442695
    %v205 = vpow.pop %v204
    %v206 = vsel %vm195, %v205, 0.0
    %207 = vadd.xlane.f32.xlu0 %v206
    %v208 = vpop.xlane.xlu0 %207
    %v209 = vsub.f32 %v194, %v202
    %v210 = vmul.f32 %v209, 1.442695
    %v211 = vpow.pop %v210
    %v212 = vsel %vm195, %v211, 0.0
    %213 = vadd.xlane.f32.xlu0 %v212
    %v214 = vpop.xlane.xlu0 %213
    %v215 = vadd.f32 %v208, %v214
    %v216 = vlog2.pop %v215
    %v217 = vmul.f32 %v216, 0.6931472
    %v218 = vadd.f32 %v217, %v202
    %v219 = vsub.f32 %v218, %v52
    %220 = vmatprep.subr.mxu0 0.0
    %221 = vmatpush1.xpose.msra.mxu0 %v37
    %222 = vmatprep.subr.mxu0 0.0
    %223 = vmatpush1.xpose.msra.mxu0 0.0
    %224 = vmatprep.subr.mxu0 0.0
    %225 = vmatpush1.xpose.msra.mxu0 0.0
    %226 = vmatprep.subr.mxu0 0.0
    %227 = vmatpush1.xpose.msra.mxu0 0.0
    %228 = vmatprep.subr.mxu0 0.0
    %229 = vmatpush1.xpose.msra.mxu0 0.0
    %230 = vmatprep.subr.mxu0 0.0
    %231 = vmatpush1.xpose.msra.mxu0 0.0
    %232 = vmatprep.subr.mxu0 0.0
    %233 = vmatpush1.xpose.msra.mxu0 0.0
    %234 = vmatprep.subr.mxu0 0.0
    %235 = vmatpush1.xpose.msra.mxu0 0.0
    %236 = vmatprep.subr.mxu0 0.0
    %237 = vmatpush1.xpose.msra.mxu0 0.0
    %238 = vmatprep.subr.mxu0 0.0
    %239 = vmatpush1.xpose.msra.mxu0 0.0
    %240 = vmatprep.subr.mxu0 0.0
    %241 = vmatpush1.xpose.msra.mxu0 0.0
    %242 = vmatprep.subr.mxu0 0.0
    %243 = vmatpush1.xpose.msra.mxu0 0.0
    %244 = vmatprep.subr.mxu0 0.0
    %245 = vmatpush1.xpose.msra.mxu0 0.0
    %246 = vmatprep.subr.mxu0 0.0
    %247 = vmatpush1.xpose.msra.mxu0 0.0
    %248 = vmatprep.subr.mxu0 0.0
    %249 = vmatpush1.xpose.msra.mxu0 0.0
    %250 = vmatprep.subr.mxu0 0.0
    %251 = vmatpush1.xpose.msra.mxu0 0.0
    %252 = vmatprep.subr.mxu0 0.0
    %253 = vmatpush1.xpose.msra.mxu0 0.0
    %254 = vmatprep.subr.mxu0 0.0
    %255 = vmatpush1.xpose.msra.mxu0 0.0
    %256 = vmatprep.subr.mxu0 0.0
    %257 = vmatpush1.xpose.msra.mxu0 0.0
    %258 = vmatprep.subr.mxu0 0.0
    %259 = vmatpush1.xpose.msra.mxu0 0.0
    %260 = vmatprep.subr.mxu0 0.0
    %261 = vmatpush1.xpose.msra.mxu0 0.0
    %262 = vmatprep.subr.mxu0 0.0
    %263 = vmatpush1.xpose.msra.mxu0 0.0
    %264 = vmatprep.subr.mxu0 0.0
    %265 = vmatpush1.xpose.msra.mxu0 0.0
    %266 = vmatprep.subr.mxu0 0.0
    %267 = vmatpush1.xpose.msra.mxu0 0.0
    %268 = vmatprep.subr.mxu0 0.0
    %269 = vmatpush1.xpose.msra.mxu0 0.0
    %270 = vmatprep.subr.mxu0 0.0
    %271 = vmatpush1.xpose.msra.mxu0 0.0
    %272 = vmatprep.subr.mxu0 0.0
    %273 = vmatpush1.xpose.msra.mxu0 0.0
    %274 = vmatprep.subr.mxu0 0.0
    %275 = vmatpush1.xpose.msra.mxu0 0.0
    %276 = vmatprep.subr.mxu0 0.0
    %277 = vmatpush1.xpose.msra.mxu0 0.0
    %278 = vmatprep.subr.mxu0 0.0
    %279 = vmatpush1.xpose.msra.mxu0 0.0
    %280 = vmatprep.subr.mxu0 0.0
    %281 = vmatpush1.xpose.msra.mxu0 0.0
    %282 = vmatprep.subr.mxu0 0.0
    %283 = vmatpush1.xpose.msra.mxu0 0.0
    %284 = vmatprep.mubr.f32.mxu0 0.0
    %285 = vmatmul.mubr.f32.gmra.mrb[0].mxu0 %v42
    %v286 = vpop.f32.mrb[0].mxu0
    %v287 = vadd.f32 0.0, %v286
    %v288 = vpop.f32.mrb[0].mxu0
    %289 = vdwg.mxu0
    %290 = vmatprep.subr.mxu0 0.0
    %291 = vmatpush1.xpose.msra.mxu0 %v38
    %292 = vmatprep.subr.mxu0 0.0
    %293 = vmatpush1.xpose.msra.mxu0 0.0
    %294 = vmatprep.subr.mxu0 0.0
    %295 = vmatpush1.xpose.msra.mxu0 0.0
    %296 = vmatprep.subr.mxu0 0.0
    %297 = vmatpush1.xpose.msra.mxu0 0.0
    %298 = vmatprep.subr.mxu0 0.0
    %299 = vmatpush1.xpose.msra.mxu0 0.0
    %300 = vmatprep.subr.mxu0 0.0
    %301 = vmatpush1.xpose.msra.mxu0 0.0
    %302 = vmatprep.subr.mxu0 0.0
    %303 = vmatpush1.xpose.msra.mxu0 0.0
    %304 = vmatprep.subr.mxu0 0.0
    %305 = vmatpush1.xpose.msra.mxu0 0.0
    %306 = vmatprep.subr.mxu0 0.0
    %307 = vmatpush1.xpose.msra.mxu0 0.0
    %308 = vmatprep.subr.mxu0 0.0
    %309 = vmatpush1.xpose.msra.mxu0 0.0
    %310 = vmatprep.subr.mxu0 0.0
    %311 = vmatpush1.xpose.msra.mxu0 0.0
    %312 = vmatprep.subr.mxu0 0.0
    %313 = vmatpush1.xpose.msra.mxu0 0.0
    %314 = vmatprep.subr.mxu0 0.0
    %315 = vmatpush1.xpose.msra.mxu0 0.0
    %316 = vmatprep.subr.mxu0 0.0
    %317 = vmatpush1.xpose.msra.mxu0 0.0
    %318 = vmatprep.subr.mxu0 0.0
    %319 = vmatpush1.xpose.msra.mxu0 0.0
    %320 = vmatprep.subr.mxu0 0.0
    %321 = vmatpush1.xpose.msra.mxu0 0.0
    %322 = vmatprep.subr.mxu0 0.0
    %323 = vmatpush1.xpose.msra.mxu0 0.0
    %324 = vmatprep.subr.mxu0 0.0
    %325 = vmatpush1.xpose.msra.mxu0 0.0
    %326 = vmatprep.subr.mxu0 0.0
    %327 = vmatpush1.xpose.msra.mxu0 0.0
    %328 = vmatprep.subr.mxu0 0.0
    %329 = vmatpush1.xpose.msra.mxu0 0.0
    %330 = vmatprep.subr.mxu0 0.0
    %331 = vmatpush1.xpose.msra.mxu0 0.0
    %332 = vmatprep.subr.mxu0 0.0
    %333 = vmatpush1.xpose.msra.mxu0 0.0
    %334 = vmatprep.subr.mxu0 0.0
    %335 = vmatpush1.xpose.msra.mxu0 0.0
    %336 = vmatprep.subr.mxu0 0.0
    %337 = vmatpush1.xpose.msra.mxu0 0.0
    %338 = vmatprep.subr.mxu0 0.0
    %339 = vmatpush1.xpose.msra.mxu0 0.0
    %340 = vmatprep.subr.mxu0 0.0
    %341 = vmatpush1.xpose.msra.mxu0 0.0
    %342 = vmatprep.subr.mxu0 0.0
    %343 = vmatpush1.xpose.msra.mxu0 0.0
    %344 = vmatprep.subr.mxu0 0.0
    %345 = vmatpush1.xpose.msra.mxu0 0.0
    %346 = vmatprep.subr.mxu0 0.0
    %347 = vmatpush1.xpose.msra.mxu0 0.0
    %348 = vmatprep.subr.mxu0 0.0
    %349 = vmatpush1.xpose.msra.mxu0 0.0
    %350 = vmatprep.subr.mxu0 0.0
    %351 = vmatpush1.xpose.msra.mxu0 0.0
    %352 = vmatprep.subr.mxu0 0.0
    %353 = vmatpush1.xpose.msra.mxu0 0.0
    %354 = vmatprep.mubr.f32.mxu0 0.0
    %355 = vmatmul.mubr.f32.gmra.mrb[0].mxu0 %v42
    %v356 = vpop.f32.mrb[0].mxu0
    %v357 = vadd.f32 0.0, %v356
    %v358 = vpop.f32.mrb[0].mxu0
    %359 = vdwg.mxu0
    %v360 = vmul.f32 %v357, 0.8
    %v361 = vsel %vm49, 0.0, %v360
    %v362 = vsel %vm195, %v287, -inf
    %363 = vmax.xlane.f32.xlu0 %v362
    %v364 = vpop.xlane.xlu0 %363
    %v365 = vsel %vm195, %v361, -inf
    %366 = vmax.xlane.f32.xlu0 %v365
    %v367 = vpop.xlane.xlu0 %366
    %v368 = vmax.f32 %v364, %v367
    %v369 = vsub.f32 %v287, %v368
    %v370 = vmul.f32 %v369, 1.442695
    %v371 = vpow.pop %v370
    %v372 = vsel %vm195, %v371, 0.0
    %373 = vadd.xlane.f32.xlu0 %v372
    %v374 = vpop.xlane.xlu0 %373
    %v375 = vsub.f32 %v361, %v368
    %v376 = vmul.f32 %v375, 1.442695
    %v377 = vpow.pop %v376
    %v378 = vsel %vm195, %v377, 0.0
    %379 = vadd.xlane.f32.xlu0 %v378
    %v380 = vpop.xlane.xlu0 %379
    %v381 = vadd.f32 %v374, %v380
    %v382 = vlog2.pop %v381
    %v383 = vmul.f32 %v382, 0.6931472
    %v384 = vadd.f32 %v383, %v368
    %v385 = vsub.f32 %v384, %v52
    %vm386 = vcmask 7168
    %v387 = vsel %vm386, %v219, 0.0
    %388 = vadd.xlane.f32.xlu0 %v387
    %v389 = vpop.xlane.xlu0 %388
    %v390 = vrot.slane %v389, 4
    %v391 = vadd.f32 %v389, %v390
    %v392 = vrot.slane %v391, 2
    %v393 = vadd.f32 %v391, %v392
    %v394 = vrot.slane %v393, 1
    %v395 = vadd.f32 %v393, %v394
    %s396 = vtos %v395
    %v397 = vsel %vm386, %v385, 0.0
    %398 = vadd.xlane.f32.xlu0 %v397
    %v399 = vpop.xlane.xlu0 %398
    %v400 = vrot.slane %v399, 4
    %v401 = vadd.f32 %v399, %v400
    %v402 = vrot.slane %v401, 2
    %v403 = vadd.f32 %v401, %v402
    %v404 = vrot.slane %v403, 1
    %v405 = vadd.f32 %v403, %v404
    %s406 = vtos %v405
    %s407 = sadd.f32 %s396, %s406
    %v408 = vstv %s407
    %v409 = vadd.f32 %v408, 0.0
    %410 = vst [vmem:[#allocation7] sm:$0xff] %v409
    // Predicated region
    $region18: #{tpu_custom_call.1} parent=1 // pred_check
      _
    $region19: #{tpu_custom_call.1} parent=1 // pred_check_branch
      %412 = sbr.rel (0) target = $region21
    $region20: #{tpu_custom_call.1} parent=1 // pred_region
      %s414 = ssub.s32 128, 128
      %415 = vsyncadd [#allocation4], %s414
      %s417 = sshll.u32 [#allocation7], 4
      %s418 = int_to_ptr.vmem [resolvable:$true] %s417
      %420 = dma.vmem_to_hbm [thread:$0]  %s418, 128, %s2, [#allocation4]
    $region21: #{tpu_custom_call.1} parent=1 // pred_fallthru
      _
    // Predicated region
    $region22: #{tpu_custom_call.1} parent=1 // pred_check
      _
    $region23: #{tpu_custom_call.1} parent=1 // pred_check_branch
      %422 = sbr.rel (0) target = $region25
    $region24: #{tpu_custom_call.1} parent=1 // pred_region
      %423 = dma.done [#allocation4], 128
    $region25: #{tpu_custom_call.1} parent=1 // pred_fallthru
      _
    %424 = vsyncpa [#allocation3], 1
    %425 = vsyncpa [#allocation6], 1
    %426 = vsyncpa [#allocation4], 1

</llo_original>
